<compile_context>
chip_gen: v7x
topology: tpu7x:2x2x1
jax: 0.10.0
libtpu: 0.0.40
codegen_flags: <defaults>
</compile_context>

<pallas_src>
import jax
import jax.numpy as jnp
from jax import lax
from jax.experimental import pallas as pl
from jax.experimental.pallas import tpu as pltpu


def _mlp_kernel(x_ref, w1p_ref, w2p_ref, o_ref):
    # x_ref  : (N, F)       activations, batch on sublanes
    # w1p_ref: (F+1, H)     rows 0..F-1 = W1^T, row F = b1
    # w2p_ref: (H+1, O)     rows 0..H-1 = W2^T, row H = b2
    # o_ref  : (N, O)
    f_dim = x_ref.shape[1]
    h_dim = w1p_ref.shape[1]

    x = x_ref[...]
    w1p = w1p_ref[...]
    w2p = w2p_ref[...]

    # ---- Layer 1 on the VPU: K=F=2 contraction as broadcast multiply-adds. ----
    # h[n, j] = sum_f x[n, f] * W1[j, f] + b1[j]
    # (1, H) bias row; each term is a (N,1) lane-broadcast * (1,H) sublane-broadcast FMA.
    h = w1p[f_dim:f_dim + 1, :]
    for f in range(f_dim):
        h = h + x[:, f:f + 1] * w1p[f:f + 1, :]
    h = jnp.maximum(h, 0.0)                       # ReLU on VPU

    # ---- Layer 2 on the MXU: single pass, contraction absorbs the transpose. ----
    # out[n, o] = sum_j h[n, j] * W2[o, j] + b2[o]
    out = lax.dot_general(
        h, w2p[:h_dim, :], (((1,), (0,)), ((), ())),
        preferred_element_type=jnp.float32)
    o_ref[...] = (out + w2p[h_dim:h_dim + 1, :]).astype(o_ref.dtype)


@jax.jit
def net_forward(x, w1p, w2p):
    """Forward pass of Net.

    x  : (N, F) float32
    w1p: (F+1, H) packed [W1^T ; b1]
    w2p: (H+1, O) packed [W2^T ; b2]
    returns (N, O) float32
    """
    n, f_dim = x.shape
    h_dim = w1p.shape[1]
    o_dim = w2p.shape[1]

    ce = pl.CostEstimate(
        flops=2 * n * (f_dim * h_dim + h_dim * o_dim),
        transcendentals=0,
        bytes_accessed=4 * (n * f_dim + (f_dim + 1) * h_dim
                            + (h_dim + 1) * o_dim + n * o_dim),
    )

    return pl.pallas_call(
        _mlp_kernel,
        out_shape=jax.ShapeDtypeStruct((n, o_dim), x.dtype),
        in_specs=[
            pl.BlockSpec(memory_space=pltpu.MemorySpace.VMEM),  # x   (N, F)
            pl.BlockSpec(memory_space=pltpu.MemorySpace.VMEM),  # w1p (F+1, H)
            pl.BlockSpec(memory_space=pltpu.MemorySpace.VMEM),  # w2p (H+1, O)
        ],
        out_specs=pl.BlockSpec(memory_space=pltpu.MemorySpace.VMEM),
        cost_estimate=ce,
    )(x, w1p, w2p)


def init_params(key, n_feature, n_hidden, n_output):
    # Deterministic init mimicking torch.nn.Linear's U(-1/sqrt(fan_in), 1/sqrt(fan_in)),
    # in native PyTorch layout: weight (out_features, in_features), bias (out_features,).
    k1, k2, k3, k4 = jax.random.split(key, 4)
    lim1 = 1.0 / jnp.sqrt(n_feature)
    lim2 = 1.0 / jnp.sqrt(n_hidden)
    w1 = jax.random.uniform(k1, (n_hidden, n_feature), jnp.float32, -lim1, lim1)
    b1 = jax.random.uniform(k2, (n_hidden,), jnp.float32, -lim1, lim1)
    w2 = jax.random.uniform(k3, (n_output, n_hidden), jnp.float32, -lim2, lim2)
    b2 = jax.random.uniform(k4, (n_output,), jnp.float32, -lim2, lim2)
    return w1, b1, w2, b2


def pack_params(w1, b1, w2, b2):
    # One-time (call-invariant) packing: cuts the per-call DMA count from 6 to 4
    # and pre-absorbs the weight transposes so the kernel contracts directly.
    w1p = jnp.concatenate([w1.T, b1[None, :]], axis=0)   # (F+1, H)
    w2p = jnp.concatenate([w2.T, b2[None, :]], axis=0)   # (H+1, O)
    return w1p, w2p


if __name__ == "__main__":
    # Shapes from the PyTorch script: Net(n_feature=2, n_hidden=10, n_output=2),
    # x = cat of two 100x2 normal clusters -> (200, 2).
    n_feature, n_hidden, n_output = 2, 10, 2
    n = 200

    key = jax.random.PRNGKey(0)
    kx, kp = jax.random.split(key)

    # Synthetic version of the two-cluster data: N(+2, 1) and N(-2, 1).
    x0 = 2.0 + jax.random.normal(kx, (n // 2, n_feature), jnp.float32)
    x1 = -2.0 + jax.random.normal(jax.random.fold_in(kx, 1), (n // 2, n_feature), jnp.float32)
    x = jnp.concatenate([x0, x1], axis=0)

    w1, b1, w2, b2 = init_params(kp, n_feature, n_hidden, n_output)
    w1p, w2p = pack_params(w1, b1, w2, b2)

    out = net_forward(x, w1p, w2p)
    out = jax.block_until_ready(out)

    # Pure-JAX reference check (PyTorch semantics: y = relu(x W1^T + b1) W2^T + b2).
    ref = jnp.maximum(x @ w1.T + b1, 0.0) @ w2.T + b2
    assert out.shape == (n, n_output)
    assert jnp.allclose(out, ref, atol=1e-5, rtol=1e-5)

    print("KERNEL_OK")
</pallas_src>

<mosaic_0001>
module attributes {stable_mosaic.version = 11 : i64} {
  func.func @_mlp_kernel(%arg0: memref<200x2xf32, #tpu.memory_space<vmem>>, %arg1: memref<3x10xf32, #tpu.memory_space<vmem>>, %arg2: memref<11x2xf32, #tpu.memory_space<vmem>>, %arg3: memref<200x2xf32, #tpu.memory_space<vmem>>) attributes {dimension_semantics = [], scalar_prefetch = 0 : i64, scratch_operands = 0 : i64, tpu.core_type = #tpu.core_type<tc>} {
    %c0 = arith.constant 0 : index
    %c0_0 = arith.constant 0 : index
    %0 = vector.load %arg0[%c0, %c0_0] : memref<200x2xf32, #tpu.memory_space<vmem>>, vector<200x2xf32>
    %c0_1 = arith.constant 0 : index
    %c0_2 = arith.constant 0 : index
    %1 = vector.load %arg1[%c0_1, %c0_2] : memref<3x10xf32, #tpu.memory_space<vmem>>, vector<3x10xf32>
    %c0_3 = arith.constant 0 : index
    %c0_4 = arith.constant 0 : index
    %2 = vector.load %arg2[%c0_3, %c0_4] : memref<11x2xf32, #tpu.memory_space<vmem>>, vector<11x2xf32>
    %3 = vector.extract_strided_slice %1 {offsets = [2, 0], sizes = [1, 10], strides = [1, 1]} : vector<3x10xf32> to vector<1x10xf32>
    %4 = vector.extract_strided_slice %0 {offsets = [0, 0], sizes = [200, 1], strides = [1, 1]} : vector<200x2xf32> to vector<200x1xf32>
    %5 = vector.extract_strided_slice %1 {offsets = [0, 0], sizes = [1, 10], strides = [1, 1]} : vector<3x10xf32> to vector<1x10xf32>
    %6 = vector.broadcast %4 : vector<200x1xf32> to vector<200x10xf32>
    %7 = vector.broadcast %5 : vector<1x10xf32> to vector<200x10xf32>
    %8 = arith.mulf %6, %7 : vector<200x10xf32>
    %9 = vector.broadcast %3 : vector<1x10xf32> to vector<200x10xf32>
    %10 = arith.addf %9, %8 : vector<200x10xf32>
    %11 = vector.extract_strided_slice %0 {offsets = [0, 1], sizes = [200, 1], strides = [1, 1]} : vector<200x2xf32> to vector<200x1xf32>
    %12 = vector.extract_strided_slice %1 {offsets = [1, 0], sizes = [1, 10], strides = [1, 1]} : vector<3x10xf32> to vector<1x10xf32>
    %13 = vector.broadcast %11 : vector<200x1xf32> to vector<200x10xf32>
    %14 = vector.broadcast %12 : vector<1x10xf32> to vector<200x10xf32>
    %15 = arith.mulf %13, %14 : vector<200x10xf32>
    %16 = arith.addf %10, %15 : vector<200x10xf32>
    %cst = arith.constant 0.000000e+00 : f32
    %17 = vector.broadcast %cst : f32 to vector<200x10xf32>
    %18 = arith.maximumf %16, %17 : vector<200x10xf32>
    %19 = vector.extract_strided_slice %2 {offsets = [0, 0], sizes = [10, 2], strides = [1, 1]} : vector<11x2xf32> to vector<10x2xf32>
    %cst_5 = arith.constant dense<0.000000e+00> : vector<200x2xf32>
    %20 = tpu.matmul %18, %19, %cst_5 {dimension_numbers = #tpu.dot_dimension_numbers<[1], [0], [0], [1], [0, 0, 1, 1], [], []>} : vector<200x10xf32>, vector<10x2xf32>, vector<200x2xf32> -> vector<200x2xf32>
    %21 = vector.extract_strided_slice %2 {offsets = [10, 0], sizes = [1, 2], strides = [1, 1]} : vector<11x2xf32> to vector<1x2xf32>
    %22 = vector.broadcast %21 : vector<1x2xf32> to vector<200x2xf32>
    %23 = arith.addf %20, %22 : vector<200x2xf32>
    %c0_6 = arith.constant 0 : index
    %c0_7 = arith.constant 0 : index
    %24 = vector.load %arg3[%c0_6, %c0_7] : memref<200x2xf32, #tpu.memory_space<vmem>>, vector<200x2xf32>
    tpu.vector_store %arg3[%c0_6, %c0_7], %23 {strides = array<i32>} : memref<200x2xf32, #tpu.memory_space<vmem>>, vector<200x2xf32>,
    return
  }
}

</mosaic_0001>

<llo_original>
// kernel: net_forward.1
$region0: #{net_forward.1}
  #allocation0 [shape = 'u32[]', space=smem, size = 0x4, offset = 0x4, fixed_abs, tag = 'smem constant byte address 0x4 - core index']
  #allocation1 [shape = 'u32[144,128]{1,0:T(1,128)}', space=vmem, size = 0x12000, scoped, tag = 'internal scratch']
  %s0 = inlined_call_operand.vmem [shape: f32[200,2], index: 0, kind: input, shape index: {}]
  %s1 = inlined_call_operand.vmem [shape: f32[3,10], index: 1, kind: input, shape index: {}]
  %s2 = inlined_call_operand.vmem [shape: f32[11,2], index: 2, kind: input, shape index: {}]
  %s3 = inlined_call_operand.vmem [shape: f32[200,2], index: 3, kind: output, shape index: {}]
  %s4 = sld [smem:[#allocation0]]
  $region22: #{net_forward.1} parent=0
    _
  %s6 = ssub.s32 1, %s4
  %s7 = scalar_select 0, %s6, %s4
  // Predicated region
  $region2: #{net_forward.1} parent=0 // pred_check
    _
  $region3: #{net_forward.1} parent=0 // pred_check_branch
    %9 = sbr.rel (0) target = $region5
  $region4: #{net_forward.1} parent=0 // pred_region
    _
  $region5: #{net_forward.1} parent=0 // pred_fallthru
    _
  // Predicated region
  $region6: #{net_forward.1} parent=0 // pred_check
    _
  $region7: #{net_forward.1} parent=0 // pred_check_branch
    %11 = sbr.rel (0) target = $region9
  $region8: #{net_forward.1} parent=0 // pred_region
    _
  $region9: #{net_forward.1} parent=0 // pred_fallthru
    _
  // Predicated region
  $region10: #{net_forward.1} parent=0 // pred_check
    _
  $region11: #{net_forward.1} parent=0 // pred_check_branch
    %13 = sbr.rel (0) target = $region13
  $region12: #{net_forward.1} parent=0 // pred_region
    _
  $region13: #{net_forward.1} parent=0 // pred_fallthru
    _
  %v14 = vld [vmem:[%s0] sm:$0xff]
  %v15 = vld [vmem:[%s0 + $0x8] sm:$0xff]
  %v16 = vld [vmem:[%s0 + $0x10] sm:$0xff]
  %v17 = vld [vmem:[%s0 + $0x18] sm:$0xff]
  %v18 = vld [vmem:[%s0 + $0x20] sm:$0xff]
  %v19 = vld [vmem:[%s0 + $0x28] sm:$0xff]
  %v20 = vld [vmem:[%s0 + $0x30] sm:$0xff]
  %v21 = vld [vmem:[%s0 + $0x38] sm:$0xff]
  %v22 = vld [vmem:[%s0 + $0x40] sm:$0xff]
  %v23 = vld [vmem:[%s0 + $0x48] sm:$0xff]
  %v24 = vld [vmem:[%s0 + $0x50] sm:$0xff]
  %v25 = vld [vmem:[%s0 + $0x58] sm:$0xff]
  %v26 = vld [vmem:[%s0 + $0x60] sm:$0xff]
  %v27 = vld [vmem:[%s0 + $0x68] sm:$0xff]
  %v28 = vld [vmem:[%s0 + $0x70] sm:$0xff]
  %v29 = vld [vmem:[%s0 + $0x78] sm:$0xff]
  %v30 = vld [vmem:[%s0 + $0x80] sm:$0xff]
  %v31 = vld [vmem:[%s0 + $0x88] sm:$0xff]
  %v32 = vld [vmem:[%s0 + $0x90] sm:$0xff]
  %v33 = vld [vmem:[%s0 + $0x98] sm:$0xff]
  %v34 = vld [vmem:[%s0 + $0xa0] sm:$0xff]
  %v35 = vld [vmem:[%s0 + $0xa8] sm:$0xff]
  %v36 = vld [vmem:[%s0 + $0xb0] sm:$0xff]
  %v37 = vld [vmem:[%s0 + $0xb8] sm:$0xff]
  %v38 = vld [vmem:[%s0 + $0xc0] sm:$0xff]
  %v39 = vld [vmem:[%s1] sm:$0x7]
  %v40 = vld [vmem:[%s2] sm:$0xff]
  %v41 = vld [vmem:[%s2 + $0x8] sm:$0x7]
  %43 = vset.pattern.permute.xlu0 0
  %44 = vperm.xlu0 %43, %v14
  %v45 = vpop.permute.xlu0 %44
  %48 = vset.pattern.permute.xlu0 0
  %49 = vperm.xlu0 %48, %v15
  %v50 = vpop.permute.xlu0 %49
  %53 = vset.pattern.permute.xlu0 0
  %54 = vperm.xlu0 %53, %v16
  %v55 = vpop.permute.xlu0 %54
  %58 = vset.pattern.permute.xlu0 0
  %59 = vperm.xlu0 %58, %v17
  %v60 = vpop.permute.xlu0 %59
  %63 = vset.pattern.permute.xlu0 0
  %64 = vperm.xlu0 %63, %v18
  %v65 = vpop.permute.xlu0 %64
  %68 = vset.pattern.permute.xlu0 0
  %69 = vperm.xlu0 %68, %v19
  %v70 = vpop.permute.xlu0 %69
  %73 = vset.pattern.permute.xlu0 0
  %74 = vperm.xlu0 %73, %v20
  %v75 = vpop.permute.xlu0 %74
  %78 = vset.pattern.permute.xlu0 0
  %79 = vperm.xlu0 %78, %v21
  %v80 = vpop.permute.xlu0 %79
  %83 = vset.pattern.permute.xlu0 0
  %84 = vperm.xlu0 %83, %v22
  %v85 = vpop.permute.xlu0 %84
  %88 = vset.pattern.permute.xlu0 0
  %89 = vperm.xlu0 %88, %v23
  %v90 = vpop.permute.xlu0 %89
  %93 = vset.pattern.permute.xlu0 0
  %94 = vperm.xlu0 %93, %v24
  %v95 = vpop.permute.xlu0 %94
  %98 = vset.pattern.permute.xlu0 0
  %99 = vperm.xlu0 %98, %v25
  %v100 = vpop.permute.xlu0 %99
  %103 = vset.pattern.permute.xlu0 0
  %104 = vperm.xlu0 %103, %v26
  %v105 = vpop.permute.xlu0 %104
  %108 = vset.pattern.permute.xlu0 0
  %109 = vperm.xlu0 %108, %v27
  %v110 = vpop.permute.xlu0 %109
  %113 = vset.pattern.permute.xlu0 0
  %114 = vperm.xlu0 %113, %v28
  %v115 = vpop.permute.xlu0 %114
  %118 = vset.pattern.permute.xlu0 0
  %119 = vperm.xlu0 %118, %v29
  %v120 = vpop.permute.xlu0 %119
  %123 = vset.pattern.permute.xlu0 0
  %124 = vperm.xlu0 %123, %v30
  %v125 = vpop.permute.xlu0 %124
  %128 = vset.pattern.permute.xlu0 0
  %129 = vperm.xlu0 %128, %v31
  %v130 = vpop.permute.xlu0 %129
  %133 = vset.pattern.permute.xlu0 0
  %134 = vperm.xlu0 %133, %v32
  %v135 = vpop.permute.xlu0 %134
  %138 = vset.pattern.permute.xlu0 0
  %139 = vperm.xlu0 %138, %v33
  %v140 = vpop.permute.xlu0 %139
  %143 = vset.pattern.permute.xlu0 0
  %144 = vperm.xlu0 %143, %v34
  %v145 = vpop.permute.xlu0 %144
  %148 = vset.pattern.permute.xlu0 0
  %149 = vperm.xlu0 %148, %v35
  %v150 = vpop.permute.xlu0 %149
  %153 = vset.pattern.permute.xlu0 0
  %154 = vperm.xlu0 %153, %v36
  %v155 = vpop.permute.xlu0 %154
  %158 = vset.pattern.permute.xlu0 0
  %159 = vperm.xlu0 %158, %v37
  %v160 = vpop.permute.xlu0 %159
  %163 = vset.pattern.permute.xlu0 0
  %164 = vperm.xlu0 %163, %v38
  %v165 = vpop.permute.xlu0 %164
  %v167 = vlaneseq
  %v168 = vshrl.u32 %v167, 7
  %v169 = vsub.s32 0, %v168
  %v170 = vrot.slane %v39, %v169
  %v171 = vmul.f32 %v45, %v170
  %v172 = vmul.f32 %v50, %v170
  %v173 = vmul.f32 %v55, %v170
  %v174 = vmul.f32 %v60, %v170
  %v175 = vmul.f32 %v65, %v170
  %v176 = vmul.f32 %v70, %v170
  %v177 = vmul.f32 %v75, %v170
  %v178 = vmul.f32 %v80, %v170
  %v179 = vmul.f32 %v85, %v170
  %v180 = vmul.f32 %v90, %v170
  %v181 = vmul.f32 %v95, %v170
  %v182 = vmul.f32 %v100, %v170
  %v183 = vmul.f32 %v105, %v170
  %v184 = vmul.f32 %v110, %v170
  %v185 = vmul.f32 %v115, %v170
  %v186 = vmul.f32 %v120, %v170
  %v187 = vmul.f32 %v125, %v170
  %v188 = vmul.f32 %v130, %v170
  %v189 = vmul.f32 %v135, %v170
  %v190 = vmul.f32 %v140, %v170
  %v191 = vmul.f32 %v145, %v170
  %v192 = vmul.f32 %v150, %v170
  %v193 = vmul.f32 %v155, %v170
  %v194 = vmul.f32 %v160, %v170
  %v195 = vmul.f32 %v165, %v170
  %v196 = vlaneseq
  %v197 = vshrl.u32 %v196, 7
  %v198 = vsub.s32 2, %v197
  %v199 = vrot.slane %v39, %v198
  %v200 = vadd.f32 %v199, %v171
  %v201 = vadd.f32 %v199, %v172
  %v202 = vadd.f32 %v199, %v173
  %v203 = vadd.f32 %v199, %v174
  %v204 = vadd.f32 %v199, %v175
  %v205 = vadd.f32 %v199, %v176
  %v206 = vadd.f32 %v199, %v177
  %v207 = vadd.f32 %v199, %v178
  %v208 = vadd.f32 %v199, %v179
  %v209 = vadd.f32 %v199, %v180
  %v210 = vadd.f32 %v199, %v181
  %v211 = vadd.f32 %v199, %v182
  %v212 = vadd.f32 %v199, %v183
  %v213 = vadd.f32 %v199, %v184
  %v214 = vadd.f32 %v199, %v185
  %v215 = vadd.f32 %v199, %v186
  %v216 = vadd.f32 %v199, %v187
  %v217 = vadd.f32 %v199, %v188
  %v218 = vadd.f32 %v199, %v189
  %v219 = vadd.f32 %v199, %v190
  %v220 = vadd.f32 %v199, %v191
  %v221 = vadd.f32 %v199, %v192
  %v222 = vadd.f32 %v199, %v193
  %v223 = vadd.f32 %v199, %v194
  %v224 = vadd.f32 %v199, %v195
  %225 = vset.pattern.permute.xlu0 1
  %226 = vperm.xlu0 %225, %v14
  %v227 = vpop.permute.xlu0 %226
  %229 = vset.pattern.permute.xlu0 1
  %230 = vperm.xlu0 %229, %v15
  %v231 = vpop.permute.xlu0 %230
  %233 = vset.pattern.permute.xlu0 1
  %234 = vperm.xlu0 %233, %v16
  %v235 = vpop.permute.xlu0 %234
  %237 = vset.pattern.permute.xlu0 1
  %238 = vperm.xlu0 %237, %v17
  %v239 = vpop.permute.xlu0 %238
  %241 = vset.pattern.permute.xlu0 1
  %242 = vperm.xlu0 %241, %v18
  %v243 = vpop.permute.xlu0 %242
  %245 = vset.pattern.permute.xlu0 1
  %246 = vperm.xlu0 %245, %v19
  %v247 = vpop.permute.xlu0 %246
  %249 = vset.pattern.permute.xlu0 1
  %250 = vperm.xlu0 %249, %v20
  %v251 = vpop.permute.xlu0 %250
  %253 = vset.pattern.permute.xlu0 1
  %254 = vperm.xlu0 %253, %v21
  %v255 = vpop.permute.xlu0 %254
  %257 = vset.pattern.permute.xlu0 1
  %258 = vperm.xlu0 %257, %v22
  %v259 = vpop.permute.xlu0 %258
  %261 = vset.pattern.permute.xlu0 1
  %262 = vperm.xlu0 %261, %v23
  %v263 = vpop.permute.xlu0 %262
  %265 = vset.pattern.permute.xlu0 1
  %266 = vperm.xlu0 %265, %v24
  %v267 = vpop.permute.xlu0 %266
  %269 = vset.pattern.permute.xlu0 1
  %270 = vperm.xlu0 %269, %v25
  %v271 = vpop.permute.xlu0 %270
  %273 = vset.pattern.permute.xlu0 1
  %274 = vperm.xlu0 %273, %v26
  %v275 = vpop.permute.xlu0 %274
  %277 = vset.pattern.permute.xlu0 1
  %278 = vperm.xlu0 %277, %v27
  %v279 = vpop.permute.xlu0 %278
  %281 = vset.pattern.permute.xlu0 1
  %282 = vperm.xlu0 %281, %v28
  %v283 = vpop.permute.xlu0 %282
  %285 = vset.pattern.permute.xlu0 1
  %286 = vperm.xlu0 %285, %v29
  %v287 = vpop.permute.xlu0 %286
  %289 = vset.pattern.permute.xlu0 1
  %290 = vperm.xlu0 %289, %v30
  %v291 = vpop.permute.xlu0 %290
  %293 = vset.pattern.permute.xlu0 1
  %294 = vperm.xlu0 %293, %v31
  %v295 = vpop.permute.xlu0 %294
  %297 = vset.pattern.permute.xlu0 1
  %298 = vperm.xlu0 %297, %v32
  %v299 = vpop.permute.xlu0 %298
  %301 = vset.pattern.permute.xlu0 1
  %302 = vperm.xlu0 %301, %v33
  %v303 = vpop.permute.xlu0 %302
  %305 = vset.pattern.permute.xlu0 1
  %306 = vperm.xlu0 %305, %v34
  %v307 = vpop.permute.xlu0 %306
  %309 = vset.pattern.permute.xlu0 1
  %310 = vperm.xlu0 %309, %v35
  %v311 = vpop.permute.xlu0 %310
  %313 = vset.pattern.permute.xlu0 1
  %314 = vperm.xlu0 %313, %v36
  %v315 = vpop.permute.xlu0 %314
  %317 = vset.pattern.permute.xlu0 1
  %318 = vperm.xlu0 %317, %v37
  %v319 = vpop.permute.xlu0 %318
  %321 = vset.pattern.permute.xlu0 1
  %322 = vperm.xlu0 %321, %v38
  %v323 = vpop.permute.xlu0 %322
  %v325 = vlaneseq
  %v326 = vshrl.u32 %v325, 7
  %v327 = vsub.s32 1, %v326
  %v328 = vrot.slane %v39, %v327
  %v329 = vmul.f32 %v227, %v328
  %v330 = vmul.f32 %v231, %v328
  %v331 = vmul.f32 %v235, %v328
  %v332 = vmul.f32 %v239, %v328
  %v333 = vmul.f32 %v243, %v328
  %v334 = vmul.f32 %v247, %v328
  %v335 = vmul.f32 %v251, %v328
  %v336 = vmul.f32 %v255, %v328
  %v337 = vmul.f32 %v259, %v328
  %v338 = vmul.f32 %v263, %v328
  %v339 = vmul.f32 %v267, %v328
  %v340 = vmul.f32 %v271, %v328
  %v341 = vmul.f32 %v275, %v328
  %v342 = vmul.f32 %v279, %v328
  %v343 = vmul.f32 %v283, %v328
  %v344 = vmul.f32 %v287, %v328
  %v345 = vmul.f32 %v291, %v328
  %v346 = vmul.f32 %v295, %v328
  %v347 = vmul.f32 %v299, %v328
  %v348 = vmul.f32 %v303, %v328
  %v349 = vmul.f32 %v307, %v328
  %v350 = vmul.f32 %v311, %v328
  %v351 = vmul.f32 %v315, %v328
  %v352 = vmul.f32 %v319, %v328
  %v353 = vmul.f32 %v323, %v328
  %v354 = vadd.f32 %v200, %v329
  %v355 = vadd.f32 %v201, %v330
  %v356 = vadd.f32 %v202, %v331
  %v357 = vadd.f32 %v203, %v332
  %v358 = vadd.f32 %v204, %v333
  %v359 = vadd.f32 %v205, %v334
  %v360 = vadd.f32 %v206, %v335
  %v361 = vadd.f32 %v207, %v336
  %v362 = vadd.f32 %v208, %v337
  %v363 = vadd.f32 %v209, %v338
  %v364 = vadd.f32 %v210, %v339
  %v365 = vadd.f32 %v211, %v340
  %v366 = vadd.f32 %v212, %v341
  %v367 = vadd.f32 %v213, %v342
  %v368 = vadd.f32 %v214, %v343
  %v369 = vadd.f32 %v215, %v344
  %v370 = vadd.f32 %v216, %v345
  %v371 = vadd.f32 %v217, %v346
  %v372 = vadd.f32 %v218, %v347
  %v373 = vadd.f32 %v219, %v348
  %v374 = vadd.f32 %v220, %v349
  %v375 = vadd.f32 %v221, %v350
  %v376 = vadd.f32 %v222, %v351
  %v377 = vadd.f32 %v223, %v352
  %v378 = vadd.f32 %v224, %v353
  %v379 = vmax.f32 %v354, 0.0
  %v380 = vmax.f32 %v355, 0.0
  %v381 = vmax.f32 %v356, 0.0
  %v382 = vmax.f32 %v357, 0.0
  %v383 = vmax.f32 %v358, 0.0
  %v384 = vmax.f32 %v359, 0.0
  %v385 = vmax.f32 %v360, 0.0
  %v386 = vmax.f32 %v361, 0.0
  %v387 = vmax.f32 %v362, 0.0
  %v388 = vmax.f32 %v363, 0.0
  %v389 = vmax.f32 %v364, 0.0
  %v390 = vmax.f32 %v365, 0.0
  %v391 = vmax.f32 %v366, 0.0
  %v392 = vmax.f32 %v367, 0.0
  %v393 = vmax.f32 %v368, 0.0
  %v394 = vmax.f32 %v369, 0.0
  %v395 = vmax.f32 %v370, 0.0
  %v396 = vmax.f32 %v371, 0.0
  %v397 = vmax.f32 %v372, 0.0
  %v398 = vmax.f32 %v373, 0.0
  %v399 = vmax.f32 %v374, 0.0
  %v400 = vmax.f32 %v375, 0.0
  %v401 = vmax.f32 %v376, 0.0
  %v402 = vmax.f32 %v377, 0.0
  %v403 = vmax.f32 %v378, 0.0
  %v404 = vlaneseq
  %v405 = vshrl.u32 %v404, 7
  %v406 = vsub.s32 2, %v405
  %v407 = vrot.slane %v41, %v406
  %vm408 = vcmask 80896
  %v410 = vsel %vm408, %v379, 0
  %v413 = vsel %vm408, %v380, 0
  %v416 = vsel %vm408, %v381, 0
  %v419 = vsel %vm408, %v382, 0
  %v422 = vsel %vm408, %v383, 0
  %v425 = vsel %vm408, %v384, 0
  %v428 = vsel %vm408, %v385, 0
  %v431 = vsel %vm408, %v386, 0
  %v434 = vsel %vm408, %v387, 0
  %v437 = vsel %vm408, %v388, 0
  %v440 = vsel %vm408, %v389, 0
  %v443 = vsel %vm408, %v390, 0
  %v446 = vsel %vm408, %v391, 0
  %v449 = vsel %vm408, %v392, 0
  %v452 = vsel %vm408, %v393, 0
  %v455 = vsel %vm408, %v394, 0
  %v458 = vsel %vm408, %v395, 0
  %v461 = vsel %vm408, %v396, 0
  %v464 = vsel %vm408, %v397, 0
  %v467 = vsel %vm408, %v398, 0
  %v470 = vsel %vm408, %v399, 0
  %v473 = vsel %vm408, %v400, 0
  %v476 = vsel %vm408, %v401, 0
  %v479 = vsel %vm408, %v402, 0
  %v482 = vsel %vm408, %v403, 0
  %vm484 = vcmask 1041408
  %v486 = vsel %vm484, %v41, 0
  %488 = vmatprep.subr.mxu0 0.0
  %489 = vmatpush1.msra.mxu0 %v40
  %490 = vmatprep.subr.mxu0 0.0
  %491 = vmatpush1.msra.mxu0 %v486
  %492 = vmatprep.subr.mxu0 0.0
  %493 = vmatpush1.msra.mxu0 0.0
  %494 = vmatprep.subr.mxu0 0.0
  %495 = vmatpush1.msra.mxu0 0.0
  %496 = vmatprep.subr.mxu0 0.0
  %497 = vmatpush1.msra.mxu0 0.0
  %498 = vmatprep.subr.mxu0 0.0
  %499 = vmatpush1.msra.mxu0 0.0
  %500 = vmatprep.subr.mxu0 0.0
  %501 = vmatpush1.msra.mxu0 0.0
  %502 = vmatprep.subr.mxu0 0.0
  %503 = vmatpush1.msra.mxu0 0.0
  %504 = vmatprep.subr.mxu0 0.0
  %505 = vmatpush1.msra.mxu0 0.0
  %506 = vmatprep.subr.mxu0 0.0
  %507 = vmatpush1.msra.mxu0 0.0
  %508 = vmatprep.subr.mxu0 0.0
  %509 = vmatpush1.msra.mxu0 0.0
  %510 = vmatprep.subr.mxu0 0.0
  %511 = vmatpush1.msra.mxu0 0.0
  %512 = vmatprep.subr.mxu0 0.0
  %513 = vmatpush1.msra.mxu0 0.0
  %514 = vmatprep.subr.mxu0 0.0
  %515 = vmatpush1.msra.mxu0 0.0
  %516 = vmatprep.subr.mxu0 0.0
  %517 = vmatpush1.msra.mxu0 0.0
  %518 = vmatprep.subr.mxu0 0.0
  %519 = vmatpush1.msra.mxu0 0.0
  %520 = vmatprep.subr.mxu0 0.0
  %521 = vmatpush1.msra.mxu0 0.0
  %522 = vmatprep.subr.mxu0 0.0
  %523 = vmatpush1.msra.mxu0 0.0
  %524 = vmatprep.subr.mxu0 0.0
  %525 = vmatpush1.msra.mxu0 0.0
  %526 = vmatprep.subr.mxu0 0.0
  %527 = vmatpush1.msra.mxu0 0.0
  %528 = vmatprep.subr.mxu0 0.0
  %529 = vmatpush1.msra.mxu0 0.0
  %530 = vmatprep.subr.mxu0 0.0
  %531 = vmatpush1.msra.mxu0 0.0
  %532 = vmatprep.subr.mxu0 0.0
  %533 = vmatpush1.msra.mxu0 0.0
  %534 = vmatprep.subr.mxu0 0.0
  %535 = vmatpush1.msra.mxu0 0.0
  %536 = vmatprep.subr.mxu0 0.0
  %537 = vmatpush1.msra.mxu0 0.0
  %538 = vmatprep.subr.mxu0 0.0
  %539 = vmatpush1.msra.mxu0 0.0
  %540 = vmatprep.subr.mxu0 0.0
  %541 = vmatpush1.msra.mxu0 0.0
  %542 = vmatprep.subr.mxu0 0.0
  %543 = vmatpush1.msra.mxu0 0.0
  %544 = vmatprep.subr.mxu0 0.0
  %545 = vmatpush1.msra.mxu0 0.0
  %546 = vmatprep.subr.mxu0 0.0
  %547 = vmatpush1.msra.mxu0 0.0
  %548 = vmatprep.subr.mxu0 0.0
  %549 = vmatpush1.msra.mxu0 0.0
  %550 = vmatprep.subr.mxu0 0.0
  %551 = vmatpush1.msra.mxu0 0.0
  %552 = vmatprep.mubr.f32.mxu0 0.0
  %553 = vmatmul.mubr.f32.gmra.mrb[0].mxu0 %v410
  %v554 = vpop.f32.mrb[0].mxu0
  %v555 = vadd.f32 %v407, %v554
  %v556 = vpop.f32.mrb[0].mxu0
  %557 = vmatprep.mubr.f32.mxu0 0.0
  %558 = vmatmul.mubr.f32.gmra.mrb[0].mxu0 %v413
  %v559 = vpop.f32.mrb[0].mxu0
  %v560 = vadd.f32 %v407, %v559
  %v561 = vpop.f32.mrb[0].mxu0
  %562 = vmatprep.mubr.f32.mxu0 0.0
  %563 = vmatmul.mubr.f32.gmra.mrb[0].mxu0 %v416
  %v564 = vpop.f32.mrb[0].mxu0
  %v565 = vadd.f32 %v407, %v564
  %v566 = vpop.f32.mrb[0].mxu0
  %567 = vmatprep.mubr.f32.mxu0 0.0
  %568 = vmatmul.mubr.f32.gmra.mrb[0].mxu0 %v419
  %v569 = vpop.f32.mrb[0].mxu0
  %v570 = vadd.f32 %v407, %v569
  %v571 = vpop.f32.mrb[0].mxu0
  %572 = vmatprep.mubr.f32.mxu0 0.0
  %573 = vmatmul.mubr.f32.gmra.mrb[0].mxu0 %v422
  %v574 = vpop.f32.mrb[0].mxu0
  %v575 = vadd.f32 %v407, %v574
  %v576 = vpop.f32.mrb[0].mxu0
  %577 = vmatprep.mubr.f32.mxu0 0.0
  %578 = vmatmul.mubr.f32.gmra.mrb[0].mxu0 %v425
  %v579 = vpop.f32.mrb[0].mxu0
  %v580 = vadd.f32 %v407, %v579
  %v581 = vpop.f32.mrb[0].mxu0
  %582 = vmatprep.mubr.f32.mxu0 0.0
  %583 = vmatmul.mubr.f32.gmra.mrb[0].mxu0 %v428
  %v584 = vpop.f32.mrb[0].mxu0
  %v585 = vadd.f32 %v407, %v584
  %v586 = vpop.f32.mrb[0].mxu0
  %587 = vmatprep.mubr.f32.mxu0 0.0
  %588 = vmatmul.mubr.f32.gmra.mrb[0].mxu0 %v431
  %v589 = vpop.f32.mrb[0].mxu0
  %v590 = vadd.f32 %v407, %v589
  %v591 = vpop.f32.mrb[0].mxu0
  %592 = vmatprep.mubr.f32.mxu0 0.0
  %593 = vmatmul.mubr.f32.gmra.mrb[0].mxu0 %v434
  %v594 = vpop.f32.mrb[0].mxu0
  %v595 = vadd.f32 %v407, %v594
  %v596 = vpop.f32.mrb[0].mxu0
  %597 = vmatprep.mubr.f32.mxu0 0.0
  %598 = vmatmul.mubr.f32.gmra.mrb[0].mxu0 %v437
  %v599 = vpop.f32.mrb[0].mxu0
  %v600 = vadd.f32 %v407, %v599
  %v601 = vpop.f32.mrb[0].mxu0
  %602 = vmatprep.mubr.f32.mxu0 0.0
  %603 = vmatmul.mubr.f32.gmra.mrb[0].mxu0 %v440
  %v604 = vpop.f32.mrb[0].mxu0
  %v605 = vadd.f32 %v407, %v604
  %v606 = vpop.f32.mrb[0].mxu0
  %607 = vmatprep.mubr.f32.mxu0 0.0
  %608 = vmatmul.mubr.f32.gmra.mrb[0].mxu0 %v443
  %v609 = vpop.f32.mrb[0].mxu0
  %v610 = vadd.f32 %v407, %v609
  %v611 = vpop.f32.mrb[0].mxu0
  %612 = vmatprep.mubr.f32.mxu0 0.0
  %613 = vmatmul.mubr.f32.gmra.mrb[0].mxu0 %v446
  %v614 = vpop.f32.mrb[0].mxu0
  %v615 = vadd.f32 %v407, %v614
  %v616 = vpop.f32.mrb[0].mxu0
  %617 = vmatprep.mubr.f32.mxu0 0.0
  %618 = vmatmul.mubr.f32.gmra.mrb[0].mxu0 %v449
  %v619 = vpop.f32.mrb[0].mxu0
  %v620 = vadd.f32 %v407, %v619
  %v621 = vpop.f32.mrb[0].mxu0
  %622 = vmatprep.mubr.f32.mxu0 0.0
  %623 = vmatmul.mubr.f32.gmra.mrb[0].mxu0 %v452
  %v624 = vpop.f32.mrb[0].mxu0
  %v625 = vadd.f32 %v407, %v624
  %v626 = vpop.f32.mrb[0].mxu0
  %627 = vmatprep.mubr.f32.mxu0 0.0
  %628 = vmatmul.mubr.f32.gmra.mrb[0].mxu0 %v455
  %v629 = vpop.f32.mrb[0].mxu0
  %v630 = vadd.f32 %v407, %v629
  %v631 = vpop.f32.mrb[0].mxu0
  %632 = vmatprep.mubr.f32.mxu0 0.0
  %633 = vmatmul.mubr.f32.gmra.mrb[0].mxu0 %v458
  %v634 = vpop.f32.mrb[0].mxu0
  %v635 = vadd.f32 %v407, %v634
  %v636 = vpop.f32.mrb[0].mxu0
  %637 = vmatprep.mubr.f32.mxu0 0.0
  %638 = vmatmul.mubr.f32.gmra.mrb[0].mxu0 %v461
  %v639 = vpop.f32.mrb[0].mxu0
  %v640 = vadd.f32 %v407, %v639
  %v641 = vpop.f32.mrb[0].mxu0
  %642 = vmatprep.mubr.f32.mxu0 0.0
  %643 = vmatmul.mubr.f32.gmra.mrb[0].mxu0 %v464
  %v644 = vpop.f32.mrb[0].mxu0
  %v645 = vadd.f32 %v407, %v644
  %v646 = vpop.f32.mrb[0].mxu0
  %647 = vmatprep.mubr.f32.mxu0 0.0
  %648 = vmatmul.mubr.f32.gmra.mrb[0].mxu0 %v467
  %v649 = vpop.f32.mrb[0].mxu0
  %v650 = vadd.f32 %v407, %v649
  %v651 = vpop.f32.mrb[0].mxu0
  %652 = vmatprep.mubr.f32.mxu0 0.0
  %653 = vmatmul.mubr.f32.gmra.mrb[0].mxu0 %v470
  %v654 = vpop.f32.mrb[0].mxu0
  %v655 = vadd.f32 %v407, %v654
  %v656 = vpop.f32.mrb[0].mxu0
  %657 = vmatprep.mubr.f32.mxu0 0.0
  %658 = vmatmul.mubr.f32.gmra.mrb[0].mxu0 %v473
  %v659 = vpop.f32.mrb[0].mxu0
  %v660 = vadd.f32 %v407, %v659
  %v661 = vpop.f32.mrb[0].mxu0
  %662 = vmatprep.mubr.f32.mxu0 0.0
  %663 = vmatmul.mubr.f32.gmra.mrb[0].mxu0 %v476
  %v664 = vpop.f32.mrb[0].mxu0
  %v665 = vadd.f32 %v407, %v664
  %v666 = vpop.f32.mrb[0].mxu0
  %667 = vmatprep.mubr.f32.mxu0 0.0
  %668 = vmatmul.mubr.f32.gmra.mrb[0].mxu0 %v479
  %v669 = vpop.f32.mrb[0].mxu0
  %v670 = vadd.f32 %v407, %v669
  %v671 = vpop.f32.mrb[0].mxu0
  %672 = vmatprep.mubr.f32.mxu0 0.0
  %673 = vmatmul.mubr.f32.gmra.mrb[0].mxu0 %v482
  %v674 = vpop.f32.mrb[0].mxu0
  %v675 = vadd.f32 %v407, %v674
  %v676 = vpop.f32.mrb[0].mxu0
  %677 = vdwg.mxu0
  %vm678 = vcmask 15360
  %679 = vst.msk [vmem:[%s3] sm:$0xff] %vm678, %v555
  %680 = vst.msk [vmem:[%s3 + $0x8] sm:$0xff] %vm678, %v560
  %681 = vst.msk [vmem:[%s3 + $0x10] sm:$0xff] %vm678, %v565
  %682 = vst.msk [vmem:[%s3 + $0x18] sm:$0xff] %vm678, %v570
  %683 = vst.msk [vmem:[%s3 + $0x20] sm:$0xff] %vm678, %v575
  %684 = vst.msk [vmem:[%s3 + $0x28] sm:$0xff] %vm678, %v580
  %685 = vst.msk [vmem:[%s3 + $0x30] sm:$0xff] %vm678, %v585
  %686 = vst.msk [vmem:[%s3 + $0x38] sm:$0xff] %vm678, %v590
  %687 = vst.msk [vmem:[%s3 + $0x40] sm:$0xff] %vm678, %v595
  %688 = vst.msk [vmem:[%s3 + $0x48] sm:$0xff] %vm678, %v600
  %689 = vst.msk [vmem:[%s3 + $0x50] sm:$0xff] %vm678, %v605
  %690 = vst.msk [vmem:[%s3 + $0x58] sm:$0xff] %vm678, %v610
  %691 = vst.msk [vmem:[%s3 + $0x60] sm:$0xff] %vm678, %v615
  %692 = vst.msk [vmem:[%s3 + $0x68] sm:$0xff] %vm678, %v620
  %693 = vst.msk [vmem:[%s3 + $0x70] sm:$0xff] %vm678, %v625
  %694 = vst.msk [vmem:[%s3 + $0x78] sm:$0xff] %vm678, %v630
  %695 = vst.msk [vmem:[%s3 + $0x80] sm:$0xff] %vm678, %v635
  %696 = vst.msk [vmem:[%s3 + $0x88] sm:$0xff] %vm678, %v640
  %697 = vst.msk [vmem:[%s3 + $0x90] sm:$0xff] %vm678, %v645
  %698 = vst.msk [vmem:[%s3 + $0x98] sm:$0xff] %vm678, %v650
  %699 = vst.msk [vmem:[%s3 + $0xa0] sm:$0xff] %vm678, %v655
  %700 = vst.msk [vmem:[%s3 + $0xa8] sm:$0xff] %vm678, %v660
  %701 = vst.msk [vmem:[%s3 + $0xb0] sm:$0xff] %vm678, %v665
  %702 = vst.msk [vmem:[%s3 + $0xb8] sm:$0xff] %vm678, %v670
  %703 = vst.msk [vmem:[%s3 + $0xc0] sm:$0xff] %vm678, %v675
  // Predicated region
  $region14: #{net_forward.1} parent=0 // pred_check
    _
  $region15: #{net_forward.1} parent=0 // pred_check_branch
    %705 = sbr.rel (0) target = $region17
  $region16: #{net_forward.1} parent=0 // pred_region
    _
  $region17: #{net_forward.1} parent=0 // pred_fallthru
    _
  // Predicated region
  $region18: #{net_forward.1} parent=0 // pred_check
    _
  $region19: #{net_forward.1} parent=0 // pred_check_branch
    %707 = sbr.rel (0) target = $region21
  $region20: #{net_forward.1} parent=0 // pred_region
    _
  $region21: #{net_forward.1} parent=0 // pred_fallthru
    _

</llo_original>
